<compile_context>
chip_gen: v7x
topology: tpu7x:2x2x1
jax: 0.10.0
libtpu: 0.0.40
codegen_flags: <defaults>
</compile_context>

<pallas_src>
import functools
import numpy as np
import jax
import jax.numpy as jnp
from jax import lax
from jax.experimental import pallas as pl
from jax.experimental.pallas import tpu as pltpu

EPS = 1e-5


# ------------------------------ in-kernel helpers ------------------------------

def _weighted_shift(scr_ref, val, w_ref, m_ref, offs, pad):
    """Weighted sum of integer-shifted copies of `val` along the flat S axis.

    val:     (C, S) value to shift.
    scr_ref: (C, S + 2*pad) VMEM scratch (zero-padded staging buffer).
    w_ref:   (C, n_terms)  per-channel weight of each term (broadcast over lanes).
    m_ref:   (n_terms, S)  per-position validity mask (broadcast over sublanes).
    offs:    static tuple of flat offsets (dt*V + dv), one per term.
    """
    C, S = val.shape
    if pad > 0:
        zeros = jnp.zeros((C, pad), jnp.float32)
        scr_ref[:, 0:pad] = zeros
        scr_ref[:, pad + S:2 * pad + S] = zeros
    scr_ref[:, pad:pad + S] = val
    acc = None
    for i, off in enumerate(offs):
        start = pad + off                                   # static Python int
        shifted = scr_ref[:, start:start + S]               # (C, S)
        term = shifted * w_ref[:, i:i + 1] * m_ref[i:i + 1, :]
        acc = term if acc is None else acc + term
    return acc


def _fwd_kernel(x_ref, s1_ref, b1_ref, win_ref, min_ref, wc_ref, bc_ref,
                wout_ref, mout_ref, y_ref, sum_ref, ssq_ref, scr_in, scr_out,
                *, offs_in, pad_in, offs_out, pad_out):
    """Per-sample: folded BN1 -> shift_in -> 1x1 conv (MXU) + ReLU -> shift_out.
    Also emits per-sample sum / sum-of-squares for the BN2 batch statistics."""
    x = x_ref[0]                                            # (Cin, S)
    h = x * s1_ref[...] + b1_ref[...]                       # BN1 folded affine
    h = _weighted_shift(scr_in, h, win_ref, min_ref, offs_in, pad_in)
    # 1x1 conv over channels on the MXU (f32 accumulation).  For production
    # channel counts, cast operands to bf16 (keep preferred_element_type=f32)
    # to unlock the v6e/v7x bf16 MXU path; kept f32 here for exactness.
    y = jnp.dot(wc_ref[...], h, preferred_element_type=jnp.float32) + bc_ref[...]
    y = jnp.maximum(y, 0.0)                                 # ReLU
    z = _weighted_shift(scr_out, y, wout_ref, mout_ref, offs_out, pad_out)
    y_ref[0] = z
    sum_ref[0] = jnp.sum(z, axis=1, keepdims=True)          # (Cout, 1)
    ssq_ref[0] = jnp.sum(z * z, axis=1, keepdims=True)      # (Cout, 1)


def _bn2_kernel(y_ref, s2_ref, b2_ref, o_ref):
    """Apply folded BN2 affine (second pass of training-mode BatchNorm)."""
    o_ref[0] = y_ref[0] * s2_ref[...] + b2_ref[...]


# --------------------------- host-side shift tables ---------------------------

def _bilinear_axis(shift, tol):
    """Factor fractional per-channel shift s into integer offsets + weights:
    out[i] = (1-frac)*x[i+floor(s)] + frac*x[i+floor(s)+1].  Offsets whose max
    weight over channels is < tol are pruned."""
    s = np.asarray(shift, np.float64)
    k0 = np.floor(s).astype(np.int64)
    frac = s - k0
    offs, rows = [], []
    for k in range(int(k0.min()), int(k0.max()) + 2):
        w = np.where(k0 == k, 1.0 - frac, 0.0) + np.where(k0 + 1 == k, frac, 0.0)
        if np.max(np.abs(w)) > tol:
            offs.append(int(k))
            rows.append(w)
    return offs, np.stack(rows, axis=0)                     # (n_k, C)


def _shift_terms(ypos, xpos, T, V, tol=1e-6):
    """Build the static term table for one bilinear (T,V) shift in the flat
    S = T*V domain: flat offsets, per-channel weights (C, n), validity masks (n, S)."""
    offs_t, wt = _bilinear_axis(ypos, tol)                  # temporal
    offs_v, wv = _bilinear_axis(xpos, tol)                  # spatial (vertex)
    S = T * V
    t_idx = np.arange(S) // V
    v_idx = np.arange(S) % V
    offs, wcols, mrows = [], [], []
    for it, dt in enumerate(offs_t):
        for iv, dv in enumerate(offs_v):
            w = wt[it] * wv[iv]                             # (C,)
            if np.max(np.abs(w)) <= tol:
                continue
            offs.append(dt * V + dv)
            wcols.append(w)
            mask = ((t_idx + dt >= 0) & (t_idx + dt < T) &
                    (v_idx + dv >= 0) & (v_idx + dv < V)).astype(np.float32)
            mrows.append(mask)
    W = jnp.asarray(np.stack(wcols, axis=1), jnp.float32)   # (C, n_terms)
    M = jnp.asarray(np.stack(mrows, axis=0), jnp.float32)   # (n_terms, S)
    return tuple(offs), W, M


# ------------------------------- glue / wrapper --------------------------------

def shift_tcn_forward(x_nchw, params, stride=1):
    # TODO(synk): stride > 1 (temporal downsampling inside shift_out) not implemented.
    assert stride == 1
    N, Cin, T, V = x_nchw.shape
    Cout = params["conv_w"].shape[0]
    S = T * V

    # Reshape only -- no HBM transpose.  Layout: (N, C, S), S in lanes.
    x = x_nchw.reshape(N, Cin, S).astype(jnp.float32)

    # Static shift term tables (host side).
    offs_in, w_in, m_in = _shift_terms(params["ypos_in"], params["xpos_in"], T, V)
    offs_out, w_out, m_out = _shift_terms(params["ypos_out"], params["xpos_out"], T, V)
    pad_in = max(abs(o) for o in offs_in)
    pad_out = max(abs(o) for o in offs_out)
    n_in, n_out = len(offs_in), len(offs_out)

    # BN1 batch stats (tiny XLA reduction) folded into one scale/bias per channel.
    m1 = jnp.mean(x, axis=(0, 2))
    v1 = jnp.mean(x * x, axis=(0, 2)) - m1 * m1
    s1 = params["bn1_w"].astype(jnp.float32) * lax.rsqrt(v1 + EPS)
    c1 = params["bn1_b"].astype(jnp.float32) - m1 * s1

    wc = jnp.asarray(params["conv_w"].reshape(Cout, Cin), jnp.float32)
    bc = jnp.asarray(params["conv_b"].reshape(Cout, 1), jnp.float32)

    cparams = pltpu.CompilerParams(
        dimension_semantics=("parallel",),
        vmem_limit_bytes=48 * 1024 * 1024)   # <= 48 MiB: safe on v7x (64 MiB phys)

    kernel1 = functools.partial(_fwd_kernel, offs_in=offs_in, pad_in=pad_in,
                                offs_out=offs_out, pad_out=pad_out)

    y, ssum, ssq = pl.pallas_call(
        kernel1,
        grid=(N,),
        in_specs=[
            pl.BlockSpec((1, Cin, S), lambda n: (n, 0, 0)),     # x (per sample)
            pl.BlockSpec((Cin, 1), lambda n: (0, 0)),           # BN1 scale
            pl.BlockSpec((Cin, 1), lambda n: (0, 0)),           # BN1 bias
            pl.BlockSpec((Cin, n_in), lambda n: (0, 0)),        # shift_in weights
            pl.BlockSpec((n_in, S), lambda n: (0, 0)),          # shift_in masks
            pl.BlockSpec((Cout, Cin), lambda n: (0, 0)),        # conv weight
            pl.BlockSpec((Cout, 1), lambda n: (0, 0)),          # conv bias
            pl.BlockSpec((Cout, n_out), lambda n: (0, 0)),      # shift_out weights
            pl.BlockSpec((n_out, S), lambda n: (0, 0)),         # shift_out masks
        ],
        out_specs=[
            pl.BlockSpec((1, Cout, S), lambda n: (n, 0, 0)),    # pre-BN2 activations
            pl.BlockSpec((1, Cout, 1), lambda n: (n, 0, 0)),    # per-sample sum
            pl.BlockSpec((1, Cout, 1), lambda n: (n, 0, 0)),    # per-sample sum sq
        ],
        out_shape=[
            jax.ShapeDtypeStruct((N, Cout, S), jnp.float32),
            jax.ShapeDtypeStruct((N, Cout, 1), jnp.float32),
            jax.ShapeDtypeStruct((N, Cout, 1), jnp.float32),
        ],
        scratch_shapes=[
            pltpu.VMEM((Cin, S + 2 * pad_in), jnp.float32),     # shift_in staging
            pltpu.VMEM((Cout, S + 2 * pad_out), jnp.float32),   # shift_out staging
        ],
        compiler_params=cparams,
    )(x, s1.reshape(Cin, 1), c1.reshape(Cin, 1), w_in, m_in, wc, bc, w_out, m_out)

    # BN2 batch stats from the per-sample partial sums (tiny wrapper reduction).
    cnt = float(N * S)
    sum_c = jnp.sum(ssum, axis=0)[:, 0]
    ssq_c = jnp.sum(ssq, axis=0)[:, 0]
    m2 = sum_c / cnt
    v2 = ssq_c / cnt - m2 * m2
    s2 = params["bn2_w"].astype(jnp.float32) * lax.rsqrt(v2 + EPS)
    c2 = params["bn2_b"].astype(jnp.float32) - m2 * s2

    out = pl.pallas_call(
        _bn2_kernel,
        grid=(N,),
        in_specs=[
            pl.BlockSpec((1, Cout, S), lambda n: (n, 0, 0)),
            pl.BlockSpec((Cout, 1), lambda n: (0, 0)),
            pl.BlockSpec((Cout, 1), lambda n: (0, 0)),
        ],
        out_specs=pl.BlockSpec((1, Cout, S), lambda n: (n, 0, 0)),
        out_shape=jax.ShapeDtypeStruct((N, Cout, S), jnp.float32),
        compiler_params=cparams,
    )(y, s2.reshape(Cout, 1), c2.reshape(Cout, 1))

    return out.reshape(N, Cout, T, V)                          # NCHW, reshape only


# ------------------------------ pure-JAX reference -----------------------------

def shift_tcn_ref(x, params):
    def bn(x, g, b):
        m = x.mean(axis=(0, 2, 3), keepdims=True)
        v = ((x - m) ** 2).mean(axis=(0, 2, 3), keepdims=True)
        return (x - m) / jnp.sqrt(v + EPS) * g.reshape(1, -1, 1, 1) + b.reshape(1, -1, 1, 1)

    def shift(x, ypos, xpos):
        N, C, T, V = x.shape
        t = jnp.arange(T, dtype=jnp.float32)[None, :, None] + ypos[:, None, None]
        v = jnp.arange(V, dtype=jnp.float32)[None, None, :] + xpos[:, None, None]
        t0, v0 = jnp.floor(t), jnp.floor(v)
        ft, fv = t - t0, v - v0

        def gather(ti, vi):
            valid = (ti >= 0) & (ti < T) & (vi >= 0) & (vi < V)
            tic = jnp.clip(ti, 0, T - 1).astype(jnp.int32)
            vic = jnp.clip(vi, 0, V - 1).astype(jnp.int32)
            g = x[:, jnp.arange(C)[:, None, None], tic, vic]
            return jnp.where(valid[None], g, 0.0)

        return (((1 - ft) * (1 - fv))[None] * gather(t0, v0)
                + ((1 - ft) * fv)[None] * gather(t0, v0 + 1)
                + (ft * (1 - fv))[None] * gather(t0 + 1, v0)
                + (ft * fv)[None] * gather(t0 + 1, v0 + 1))

    x = x.astype(jnp.float32)
    x = bn(x, params["bn1_w"], params["bn1_b"])
    x = shift(x, params["ypos_in"], params["xpos_in"])
    w2 = params["conv_w"].reshape(params["conv_w"].shape[0], -1)
    x = jnp.einsum('oc,nctv->notv', w2, x,
                   precision=jax.lax.Precision.HIGHEST) + params["conv_b"].reshape(1, -1, 1, 1)
    x = jnp.maximum(x, 0.0)
    x = shift(x, params["ypos_out"], params["xpos_out"])
    x = bn(x, params["bn2_w"], params["bn2_b"])
    return x


# ------------------------------------ main -------------------------------------

if __name__ == "__main__":
    N, Cin, Cout, T, V = 2, 4, 8, 16, 16

    key = jax.random.PRNGKey(0)
    kx, k0, k1, k2, k3, k4, k5 = jax.random.split(key, 7)

    params = dict(
        bn1_w=jnp.ones((Cin,), jnp.float32),   # BatchNorm2d default init
        bn1_b=jnp.zeros((Cin,), jnp.float32),
        bn2_w=jnp.ones((Cout,), jnp.float32),  # bn_init(bn2, 1)
        bn2_b=jnp.zeros((Cout,), jnp.float32),
        # Shift(channel, stride=1, init_scale=1): xpos ~ U(-1e-8,1e-8), ypos ~ U(-1,1)
        xpos_in=jax.random.uniform(k0, (Cin,), jnp.float32, -1e-8, 1e-8),
        ypos_in=jax.random.uniform(k1, (Cin,), jnp.float32, -1.0, 1.0),
        xpos_out=jax.random.uniform(k2, (Cout,), jnp.float32, -1e-8, 1e-8),
        ypos_out=jax.random.uniform(k3, (Cout,), jnp.float32, -1.0, 1.0),
        # Conv2d(Cin, Cout, 1): kaiming_normal fan_out -> std = sqrt(2/Cout)
        conv_w=jax.random.normal(k4, (Cout, Cin, 1, 1), jnp.float32) * np.sqrt(2.0 / Cout),
        conv_b=jax.random.uniform(k5, (Cout,), jnp.float32,
                                  -1.0 / np.sqrt(Cin), 1.0 / np.sqrt(Cin)),
    )

    x = jax.random.normal(kx, (N, Cin, T, V), jnp.float32)   # NCHW = (N, C, T, V)

    out = shift_tcn_forward(x, params, stride=1)
    out = jax.block_until_ready(out)

    ref = shift_tcn_ref(x, params)
    np.testing.assert_allclose(np.asarray(out), np.asarray(ref), rtol=2e-3, atol=2e-3)

    print("KERNEL_OK")
</pallas_src>

<mosaic_0001>
module attributes {stable_mosaic.version = 11 : i64} {
  func.func @_fwd_kernel(%arg0: i32, %arg1: memref<1x4x256xf32, #tpu.memory_space<vmem>>, %arg2: memref<4x1xf32, #tpu.memory_space<vmem>>, %arg3: memref<4x1xf32, #tpu.memory_space<vmem>>, %arg4: memref<4x3xf32, #tpu.memory_space<vmem>>, %arg5: memref<3x256xf32, #tpu.memory_space<vmem>>, %arg6: memref<8x4xf32, #tpu.memory_space<vmem>>, %arg7: memref<8x1xf32, #tpu.memory_space<vmem>>, %arg8: memref<8x3xf32, #tpu.memory_space<vmem>>, %arg9: memref<3x256xf32, #tpu.memory_space<vmem>>, %arg10: memref<1x8x256xf32, #tpu.memory_space<vmem>>, %arg11: memref<1x8x1xf32, #tpu.memory_space<vmem>>, %arg12: memref<1x8x1xf32, #tpu.memory_space<vmem>>, %arg13: memref<4x288xf32, #tpu.memory_space<vmem>>, %arg14: memref<8x288xf32, #tpu.memory_space<vmem>>) attributes {dimension_semantics = [#tpu.dimension_semantics<parallel>], iteration_bounds = array<i64: 2>, scalar_prefetch = 0 : i64, scratch_operands = 2 : i64, tpu.core_type = #tpu.core_type<tc>, window_params = [{transform_indices = @transform_0, window_bounds = array<i64: 1, 4, 256>}, {pipeline_mode = #tpu.pipeline_mode<synchronous>, transform_indices = @transform_1, window_bounds = array<i64: 4, 1>}, {pipeline_mode = #tpu.pipeline_mode<synchronous>, transform_indices = @transform_2, window_bounds = array<i64: 4, 1>}, {pipeline_mode = #tpu.pipeline_mode<synchronous>, transform_indices = @transform_3, window_bounds = array<i64: 4, 3>}, {pipeline_mode = #tpu.pipeline_mode<synchronous>, transform_indices = @transform_4, window_bounds = array<i64: 3, 256>}, {pipeline_mode = #tpu.pipeline_mode<synchronous>, transform_indices = @transform_5, window_bounds = array<i64: 8, 4>}, {pipeline_mode = #tpu.pipeline_mode<synchronous>, transform_indices = @transform_6, window_bounds = array<i64: 8, 1>}, {pipeline_mode = #tpu.pipeline_mode<synchronous>, transform_indices = @transform_7, window_bounds = array<i64: 8, 3>}, {pipeline_mode = #tpu.pipeline_mode<synchronous>, transform_indices = @transform_8, window_bounds = array<i64: 3, 256>}, {transform_indices = @transform_9, window_bounds = array<i64: 1, 8, 256>}, {transform_indices = @transform_10, window_bounds = array<i64: 1, 8, 1>}, {transform_indices = @transform_11, window_bounds = array<i64: 1, 8, 1>}]} {
    %c0 = arith.constant 0 : index
    %c0_0 = arith.constant 0 : index
    %c0_1 = arith.constant 0 : index
    %0 = vector.load %arg1[%c0, %c0_0, %c0_1] : memref<1x4x256xf32, #tpu.memory_space<vmem>>, vector<1x4x256xf32>
    %1 = vector.shape_cast %0 : vector<1x4x256xf32> to vector<4x256xf32>
    %c0_2 = arith.constant 0 : index
    %c0_3 = arith.constant 0 : index
    %2 = vector.load %arg2[%c0_2, %c0_3] : memref<4x1xf32, #tpu.memory_space<vmem>>, vector<4x1xf32>
    %3 = vector.broadcast %2 : vector<4x1xf32> to vector<4x256xf32>
    %4 = arith.mulf %1, %3 : vector<4x256xf32>
    %c0_4 = arith.constant 0 : index
    %c0_5 = arith.constant 0 : index
    %5 = vector.load %arg3[%c0_4, %c0_5] : memref<4x1xf32, #tpu.memory_space<vmem>>, vector<4x1xf32>
    %6 = vector.broadcast %5 : vector<4x1xf32> to vector<4x256xf32>
    %7 = arith.addf %4, %6 : vector<4x256xf32>
    %cst = arith.constant 0.000000e+00 : f32
    %8 = vector.broadcast %cst : f32 to vector<4x16xf32>
    %c0_6 = arith.constant 0 : index
    %c0_7 = arith.constant 0 : index
    %9 = vector.load %arg13[%c0_6, %c0_7] : memref<4x288xf32, #tpu.memory_space<vmem>>, vector<4x16xf32>
    tpu.vector_store %arg13[%c0_6, %c0_7], %8 {strides = array<i32>} : memref<4x288xf32, #tpu.memory_space<vmem>>, vector<4x16xf32>,
    %c0_8 = arith.constant 0 : index
    %c272 = arith.constant 272 : index
    %10 = vector.load %arg13[%c0_8, %c272] : memref<4x288xf32, #tpu.memory_space<vmem>>, vector<4x16xf32>
    tpu.vector_store %arg13[%c0_8, %c272], %8 {strides = array<i32>} : memref<4x288xf32, #tpu.memory_space<vmem>>, vector<4x16xf32>,
    %c0_9 = arith.constant 0 : index
    %c16 = arith.constant 16 : index
    %11 = vector.load %arg13[%c0_9, %c16] : memref<4x288xf32, #tpu.memory_space<vmem>>, vector<4x256xf32>
    tpu.vector_store %arg13[%c0_9, %c16], %7 {strides = array<i32>} : memref<4x288xf32, #tpu.memory_space<vmem>>, vector<4x256xf32>,
    %c0_10 = arith.constant 0 : index
    %c0_11 = arith.constant 0 : index
    %12 = vector.load %arg13[%c0_10, %c0_11] : memref<4x288xf32, #tpu.memory_space<vmem>>, vector<4x256xf32>
    %c0_12 = arith.constant 0 : index
    %c0_13 = arith.constant 0 : index
    %13 = vector.load %arg4[%c0_12, %c0_13] : memref<4x3xf32, #tpu.memory_space<vmem>>, vector<4x1xf32>
    %14 = vector.broadcast %13 : vector<4x1xf32> to vector<4x256xf32>
    %15 = arith.mulf %12, %14 : vector<4x256xf32>
    %c0_14 = arith.constant 0 : index
    %c0_15 = arith.constant 0 : index
    %16 = vector.load %arg5[%c0_14, %c0_15] : memref<3x256xf32, #tpu.memory_space<vmem>>, vector<1x256xf32>
    %17 = vector.broadcast %16 : vector<1x256xf32> to vector<4x256xf32>
    %18 = arith.mulf %15, %17 : vector<4x256xf32>
    %c0_16 = arith.constant 0 : index
    %c16_17 = arith.constant 16 : index
    %19 = vector.load %arg13[%c0_16, %c16_17] : memref<4x288xf32, #tpu.memory_space<vmem>>, vector<4x256xf32>
    %c0_18 = arith.constant 0 : index
    %c1 = arith.constant 1 : index
    %20 = vector.load %arg4[%c0_18, %c1] : memref<4x3xf32, #tpu.memory_space<vmem>>, vector<4x1xf32>
    %21 = vector.broadcast %20 : vector<4x1xf32> to vector<4x256xf32>
    %22 = arith.mulf %19, %21 : vector<4x256xf32>
    %c1_19 = arith.constant 1 : index
    %c0_20 = arith.constant 0 : index
    %23 = vector.load %arg5[%c1_19, %c0_20] : memref<3x256xf32, #tpu.memory_space<vmem>>, vector<1x256xf32>
    %24 = vector.broadcast %23 : vector<1x256xf32> to vector<4x256xf32>
    %25 = arith.mulf %22, %24 : vector<4x256xf32>
    %26 = arith.addf %18, %25 : vector<4x256xf32>
    %c0_21 = arith.constant 0 : index
    %c32 = arith.constant 32 : index
    %27 = vector.load %arg13[%c0_21, %c32] : memref<4x288xf32, #tpu.memory_space<vmem>>, vector<4x256xf32>
    %c0_22 = arith.constant 0 : index
    %c2 = arith.constant 2 : index
    %28 = vector.load %arg4[%c0_22, %c2] : memref<4x3xf32, #tpu.memory_space<vmem>>, vector<4x1xf32>
    %29 = vector.broadcast %28 : vector<4x1xf32> to vector<4x256xf32>
    %30 = arith.mulf %27, %29 : vector<4x256xf32>
    %c2_23 = arith.constant 2 : index
    %c0_24 = arith.constant 0 : index
    %31 = vector.load %arg5[%c2_23, %c0_24] : memref<3x256xf32, #tpu.memory_space<vmem>>, vector<1x256xf32>
    %32 = vector.broadcast %31 : vector<1x256xf32> to vector<4x256xf32>
    %33 = arith.mulf %30, %32 : vector<4x256xf32>
    %34 = arith.addf %26, %33 : vector<4x256xf32>
    %c0_25 = arith.constant 0 : index
    %c0_26 = arith.constant 0 : index
    %35 = vector.load %arg6[%c0_25, %c0_26] : memref<8x4xf32, #tpu.memory_space<vmem>>, vector<8x4xf32>
    %cst_27 = arith.constant dense<0.000000e+00> : vector<8x256xf32>
    %36 = tpu.matmul %35, %34, %cst_27 {dimension_numbers = #tpu.dot_dimension_numbers<[1], [0], [0], [1], [0, 0, 1, 1], [], []>} : vector<8x4xf32>, vector<4x256xf32>, vector<8x256xf32> -> vector<8x256xf32>
    %c0_28 = arith.constant 0 : index
    %c0_29 = arith.constant 0 : index
    %37 = vector.load %arg7[%c0_28, %c0_29] : memref<8x1xf32, #tpu.memory_space<vmem>>, vector<8x1xf32>
    %38 = vector.broadcast %37 : vector<8x1xf32> to vector<8x256xf32>
    %39 = arith.addf %36, %38 : vector<8x256xf32>
    %cst_30 = arith.constant 0.000000e+00 : f32
    %40 = vector.broadcast %cst_30 : f32 to vector<8x256xf32>
    %41 = arith.maximumf %39, %40 : vector<8x256xf32>
    %cst_31 = arith.constant 0.000000e+00 : f32
    %42 = vector.broadcast %cst_31 : f32 to vector<8x16xf32>
    %c0_32 = arith.constant 0 : index
    %c0_33 = arith.constant 0 : index
    %43 = vector.load %arg14[%c0_32, %c0_33] : memref<8x288xf32, #tpu.memory_space<vmem>>, vector<8x16xf32>
    tpu.vector_store %arg14[%c0_32, %c0_33], %42 {strides = array<i32>} : memref<8x288xf32, #tpu.memory_space<vmem>>, vector<8x16xf32>,
    %c0_34 = arith.constant 0 : index
    %c272_35 = arith.constant 272 : index
    %44 = vector.load %arg14[%c0_34, %c272_35] : memref<8x288xf32, #tpu.memory_space<vmem>>, vector<8x16xf32>
    tpu.vector_store %arg14[%c0_34, %c272_35], %42 {strides = array<i32>} : memref<8x288xf32, #tpu.memory_space<vmem>>, vector<8x16xf32>,
    %c0_36 = arith.constant 0 : index
    %c16_37 = arith.constant 16 : index
    %45 = vector.load %arg14[%c0_36, %c16_37] : memref<8x288xf32, #tpu.memory_space<vmem>>, vector<8x256xf32>
    tpu.vector_store %arg14[%c0_36, %c16_37], %41 {strides = array<i32>} : memref<8x288xf32, #tpu.memory_space<vmem>>, vector<8x256xf32>,
    %c0_38 = arith.constant 0 : index
    %c0_39 = arith.constant 0 : index
    %46 = vector.load %arg14[%c0_38, %c0_39] : memref<8x288xf32, #tpu.memory_space<vmem>>, vector<8x256xf32>
    %c0_40 = arith.constant 0 : index
    %c0_41 = arith.constant 0 : index
    %47 = vector.load %arg8[%c0_40, %c0_41] : memref<8x3xf32, #tpu.memory_space<vmem>>, vector<8x1xf32>
    %48 = vector.broadcast %47 : vector<8x1xf32> to vector<8x256xf32>
    %49 = arith.mulf %46, %48 : vector<8x256xf32>
    %c0_42 = arith.constant 0 : index
    %c0_43 = arith.constant 0 : index
    %50 = vector.load %arg9[%c0_42, %c0_43] : memref<3x256xf32, #tpu.memory_space<vmem>>, vector<1x256xf32>
    %51 = vector.broadcast %50 : vector<1x256xf32> to vector<8x256xf32>
    %52 = arith.mulf %49, %51 : vector<8x256xf32>
    %c0_44 = arith.constant 0 : index
    %c16_45 = arith.constant 16 : index
    %53 = vector.load %arg14[%c0_44, %c16_45] : memref<8x288xf32, #tpu.memory_space<vmem>>, vector<8x256xf32>
    %c0_46 = arith.constant 0 : index
    %c1_47 = arith.constant 1 : index
    %54 = vector.load %arg8[%c0_46, %c1_47] : memref<8x3xf32, #tpu.memory_space<vmem>>, vector<8x1xf32>
    %55 = vector.broadcast %54 : vector<8x1xf32> to vector<8x256xf32>
    %56 = arith.mulf %53, %55 : vector<8x256xf32>
    %c1_48 = arith.constant 1 : index
    %c0_49 = arith.constant 0 : index
    %57 = vector.load %arg9[%c1_48, %c0_49] : memref<3x256xf32, #tpu.memory_space<vmem>>, vector<1x256xf32>
    %58 = vector.broadcast %57 : vector<1x256xf32> to vector<8x256xf32>
    %59 = arith.mulf %56, %58 : vector<8x256xf32>
    %60 = arith.addf %52, %59 : vector<8x256xf32>
    %c0_50 = arith.constant 0 : index
    %c32_51 = arith.constant 32 : index
    %61 = vector.load %arg14[%c0_50, %c32_51] : memref<8x288xf32, #tpu.memory_space<vmem>>, vector<8x256xf32>
    %c0_52 = arith.constant 0 : index
    %c2_53 = arith.constant 2 : index
    %62 = vector.load %arg8[%c0_52, %c2_53] : memref<8x3xf32, #tpu.memory_space<vmem>>, vector<8x1xf32>
    %63 = vector.broadcast %62 : vector<8x1xf32> to vector<8x256xf32>
    %64 = arith.mulf %61, %63 : vector<8x256xf32>
    %c2_54 = arith.constant 2 : index
    %c0_55 = arith.constant 0 : index
    %65 = vector.load %arg9[%c2_54, %c0_55] : memref<3x256xf32, #tpu.memory_space<vmem>>, vector<1x256xf32>
    %66 = vector.broadcast %65 : vector<1x256xf32> to vector<8x256xf32>
    %67 = arith.mulf %64, %66 : vector<8x256xf32>
    %68 = arith.addf %60, %67 : vector<8x256xf32>
    %c0_56 = arith.constant 0 : index
    %c0_57 = arith.constant 0 : index
    %c0_58 = arith.constant 0 : index
    %69 = vector.load %arg10[%c0_56, %c0_57, %c0_58] : memref<1x8x256xf32, #tpu.memory_space<vmem>>, vector<1x8x256xf32>
    %70 = vector.shape_cast %69 : vector<1x8x256xf32> to vector<8x256xf32>
    %71 = vector.shape_cast %68 : vector<8x256xf32> to vector<1x8x256xf32>
    tpu.vector_store %arg10[%c0_56, %c0_57, %c0_58], %71 {strides = array<i32>} : memref<1x8x256xf32, #tpu.memory_space<vmem>>, vector<1x8x256xf32>,
    %cst_59 = arith.constant dense<0.000000e+00> : vector<8xf32>
    %72 = vector.multi_reduction <add>, %68, %cst_59 [1] : vector<8x256xf32> to vector<8xf32>
    %73 = vector.shape_cast %72 : vector<8xf32> to vector<8x1xf32>
    %c0_60 = arith.constant 0 : index
    %c0_61 = arith.constant 0 : index
    %c0_62 = arith.constant 0 : index
    %74 = vector.load %arg11[%c0_60, %c0_61, %c0_62] : memref<1x8x1xf32, #tpu.memory_space<vmem>>, vector<1x8x1xf32>
    %75 = vector.shape_cast %74 : vector<1x8x1xf32> to vector<8x1xf32>
    %76 = vector.shape_cast %73 : vector<8x1xf32> to vector<1x8x1xf32>
    tpu.vector_store %arg11[%c0_60, %c0_61, %c0_62], %76 {strides = array<i32>} : memref<1x8x1xf32, #tpu.memory_space<vmem>>, vector<1x8x1xf32>,
    %77 = arith.mulf %68, %68 : vector<8x256xf32>
    %cst_63 = arith.constant dense<0.000000e+00> : vector<8xf32>
    %78 = vector.multi_reduction <add>, %77, %cst_63 [1] : vector<8x256xf32> to vector<8xf32>
    %79 = vector.shape_cast %78 : vector<8xf32> to vector<8x1xf32>
    %c0_64 = arith.constant 0 : index
    %c0_65 = arith.constant 0 : index
    %c0_66 = arith.constant 0 : index
    %80 = vector.load %arg12[%c0_64, %c0_65, %c0_66] : memref<1x8x1xf32, #tpu.memory_space<vmem>>, vector<1x8x1xf32>
    %81 = vector.shape_cast %80 : vector<1x8x1xf32> to vector<8x1xf32>
    %82 = vector.shape_cast %79 : vector<8x1xf32> to vector<1x8x1xf32>
    tpu.vector_store %arg12[%c0_64, %c0_65, %c0_66], %82 {strides = array<i32>} : memref<1x8x1xf32, #tpu.memory_space<vmem>>, vector<1x8x1xf32>,
    return
  }
  func.func @transform_0(%arg0: i32) -> (i32, i32, i32) {
    %c0_i32 = arith.constant 0 : i32
    %c0_i32_0 = arith.constant 0 : i32
    %c0_i32_1 = arith.constant 0 : i32
    return %arg0, %c0_i32, %c0_i32_0 : i32, i32, i32
  }
  func.func @transform_1(%arg0: i32) -> (i32, i32) {
    %c0_i32 = arith.constant 0 : i32
    %c0_i32_0 = arith.constant 0 : i32
    %c0_i32_1 = arith.constant 0 : i32
    return %c0_i32, %c0_i32_0 : i32, i32
  }
  func.func @transform_2(%arg0: i32) -> (i32, i32) {
    %c0_i32 = arith.constant 0 : i32
    %c0_i32_0 = arith.constant 0 : i32
    %c0_i32_1 = arith.constant 0 : i32
    return %c0_i32, %c0_i32_0 : i32, i32
  }
  func.func @transform_3(%arg0: i32) -> (i32, i32) {
    %c0_i32 = arith.constant 0 : i32
    %c0_i32_0 = arith.constant 0 : i32
    %c0_i32_1 = arith.constant 0 : i32
    return %c0_i32, %c0_i32_0 : i32, i32
  }
  func.func @transform_4(%arg0: i32) -> (i32, i32) {
    %c0_i32 = arith.constant 0 : i32
    %c0_i32_0 = arith.constant 0 : i32
    %c0_i32_1 = arith.constant 0 : i32
    return %c0_i32, %c0_i32_0 : i32, i32
  }
  func.func @transform_5(%arg0: i32) -> (i32, i32) {
    %c0_i32 = arith.constant 0 : i32
    %c0_i32_0 = arith.constant 0 : i32
    %c0_i32_1 = arith.constant 0 : i32
    return %c0_i32, %c0_i32_0 : i32, i32
  }
  func.func @transform_6(%arg0: i32) -> (i32, i32) {
    %c0_i32 = arith.constant 0 : i32
    %c0_i32_0 = arith.constant 0 : i32
    %c0_i32_1 = arith.constant 0 : i32
    return %c0_i32, %c0_i32_0 : i32, i32
  }
  func.func @transform_7(%arg0: i32) -> (i32, i32) {
    %c0_i32 = arith.constant 0 : i32
    %c0_i32_0 = arith.constant 0 : i32
    %c0_i32_1 = arith.constant 0 : i32
    return %c0_i32, %c0_i32_0 : i32, i32
  }
  func.func @transform_8(%arg0: i32) -> (i32, i32) {
    %c0_i32 = arith.constant 0 : i32
    %c0_i32_0 = arith.constant 0 : i32
    %c0_i32_1 = arith.constant 0 : i32
    return %c0_i32, %c0_i32_0 : i32, i32
  }
  func.func @transform_9(%arg0: i32) -> (i32, i32, i32) {
    %c0_i32 = arith.constant 0 : i32
    %c0_i32_0 = arith.constant 0 : i32
    %c0_i32_1 = arith.constant 0 : i32
    return %arg0, %c0_i32, %c0_i32_0 : i32, i32, i32
  }
  func.func @transform_10(%arg0: i32) -> (i32, i32, i32) {
    %c0_i32 = arith.constant 0 : i32
    %c0_i32_0 = arith.constant 0 : i32
    %c0_i32_1 = arith.constant 0 : i32
    return %arg0, %c0_i32, %c0_i32_0 : i32, i32, i32
  }
  func.func @transform_11(%arg0: i32) -> (i32, i32, i32) {
    %c0_i32 = arith.constant 0 : i32
    %c0_i32_0 = arith.constant 0 : i32
    %c0_i32_1 = arith.constant 0 : i32
    return %arg0, %c0_i32, %c0_i32_0 : i32, i32, i32
  }
}

</mosaic_0001>

<llo_original>
// kernel: tpu_custom_call.1
$region0: #{tpu_custom_call.1}
  #allocation0 [shape = 'u32[]', space=smem, size = 0x4, offset = 0x4, fixed_abs, tag = 'smem constant byte address 0x4 - core index']
  #allocation1 [shape = 'u32[144,128]{1,0:T(1,128)}', space=vmem, size = 0x12000, scoped, tag = 'internal scratch']
  #allocation2 [shape = 'f32[4,288]{1,0:T(4,128)}', space=vmem, size = 0x1800, scoped, tag = 'scratch operand']
  #allocation3 [shape = 'f32[8,288]{1,0:T(8,128)}', space=vmem, size = 0x3000, scoped, tag = 'scratch operand']
  %s0 = inlined_call_operand.vmem [shape: f32[2,4,256], index: 0, kind: input, shape index: {}]
  %s1 = inlined_call_operand.vmem [shape: f32[4,1], index: 1, kind: input, shape index: {}]
  %s2 = inlined_call_operand.vmem [shape: f32[4,1], index: 2, kind: input, shape index: {}]
  %s3 = inlined_call_operand.vmem [shape: f32[4,3], index: 3, kind: input, shape index: {}]
  %s4 = inlined_call_operand.vmem [shape: f32[3,256], index: 4, kind: input, shape index: {}]
  %s5 = inlined_call_operand.vmem [shape: f32[8,4], index: 5, kind: input, shape index: {}]
  %s6 = inlined_call_operand.vmem [shape: f32[8,1], index: 6, kind: input, shape index: {}]
  %s7 = inlined_call_operand.vmem [shape: f32[8,3], index: 7, kind: input, shape index: {}]
  %s8 = inlined_call_operand.vmem [shape: f32[3,256], index: 8, kind: input, shape index: {}]
  %s9 = inlined_call_operand.hbm [shape: f32[2,8,256], index: 9, kind: output, shape index: {0}]
  %s10 = inlined_call_operand.vmem [shape: f32[2,8,1], index: 10, kind: output, shape index: {1}]
  %s11 = inlined_call_operand.vmem [shape: f32[2,8,1], index: 11, kind: output, shape index: {2}]
  %12 = xla_tuple %s9, %s10, %s11
  %s13 = sld [smem:[#allocation0]]
  $region85: #{tpu_custom_call.1} parent=0
    _
  %s15 = ssub.s32 1, %s13
  %s16 = scalar_select 0, %s15, %s13
  $region1: #{tpu_custom_call.1} parent=0
    #allocation4 [shape = 'u8[16384]{0}', space=vmem, size = 0x4000, scoped, tag = 'output window, operand 0']
    #allocation5 [shape = 's32[2]{0}', space=sflag, size = 0x8, scoped, tag = 'scoped memory for tpu_custom_call.1']
    %17 = vsyncpa [#allocation5], 0
    %s18 = scalar_lea.sflag [#allocation5], 1
    %19 = vsyncpa %s18, 0
    loop: start=0, step=1, limit=4
    $region2: #{tpu_custom_call.1} parent=1 // loop_pre_header
      _
    $region3: #{tpu_custom_call.1} parent=1 // loop_header
      %s21 = sphi 0, %s25
      %p22 = scmp.ge.s32.totalorder %s21, 4
      %s31 = sphi 0, %s33
      %s34 = sphi 0, %s31
      %s35 = sphi 0, %s34
      %s51 = sphi 0, %s35
      %s55 = sphi 0, %s55
      %s57 = sphi 0, %s55
      %s58 = sphi 0, %s57
      %s72 = sphi 0, %s58
      %s76 = sphi 0, %s76
      %s78 = sphi 0, %s76
      %s79 = sphi 0, %s78
      %s93 = sphi 0, %s79
      %s97 = sphi 0, %s97
      %s99 = sphi 0, %s97
      %s100 = sphi 0, %s99
      %s114 = sphi 0, %s100
      %s118 = sphi 0, %s118
      %s120 = sphi 0, %s118
      %s121 = sphi 0, %s120
      %s135 = sphi 0, %s121
      %s139 = sphi 0, %s139
      %s141 = sphi 0, %s139
      %s142 = sphi 0, %s141
      %s156 = sphi 0, %s142
      %s160 = sphi 0, %s160
      %s162 = sphi 0, %s160
      %s163 = sphi 0, %s162
      %s177 = sphi 0, %s163
      %s181 = sphi 0, %s181
      %s183 = sphi 0, %s181
      %s184 = sphi 0, %s183
      %s198 = sphi 0, %s184
      %s202 = sphi 0, %s202
      %s204 = sphi 0, %s202
      %s205 = sphi 0, %s204
      %s219 = sphi 0, %s205
      %s225 = sphi 0, %s227
      %s228 = sphi 0, %s225
      %s229 = sphi 0, %s228
      %s245 = sphi 0, %s229
      %s251 = sphi 0, %s253
      %s254 = sphi 0, %s251
      %s255 = sphi 0, %s254
      %s271 = sphi 0, %s255
      %s277 = sphi 0, %s279
      %s280 = sphi 0, %s277
      %s281 = sphi 0, %s280
      %s297 = sphi 0, %s281
    $region4: #{tpu_custom_call.1} parent=1 // loop_header_branch
      %24 = sbr.rel (%p22) target = $region8
    $region5: #{tpu_custom_call.1} parent=1 // loop_body
      %s26 = ssub.s32 %s21, 1
      %s27 = ssub.s32 %s21, 2
      %s28 = sadd.s32 %s21, 1
      %s29 = ssub.s32 %s21, %s28
      %p30 = scmp.eq.s32.totalorder %s29, 0
      %s32 = sadd.s32 %s31, 1
      %s33 = scalar_select %p30, %s31, %s32
      %p36 = pneg %p30
      %p37 = scmp.eq.s32.totalorder %s21, 1
      %p38 = por %p36, %p37
      %p39 = scmp.ne.s32.totalorder %s31, %s34
      %p40 = scmp.eq.s32.totalorder %s21, 0
      %p41 = por %p39, %p40
      %p42 = scmp.ne.s32.totalorder %s31, %s34
      %p43 = scmp.eq.s32.totalorder %s26, 1
      %p44 = por %p42, %p43
      %p45 = scmp.ne.s32.totalorder %s34, %s35
      %p46 = scmp.eq.s32.totalorder %s26, 0
      %p47 = por %p45, %p46
      %p48 = scmp.ne.s32.totalorder %s34, %s35
      %p49 = scmp.eq.s32.totalorder %s27, 1
      %p50 = por %p48, %p49
      %p52 = scmp.ne.s32.totalorder %s35, %s51
      %p53 = scmp.eq.s32.totalorder %s27, 0
      %p54 = por %p52, %p53
      %s56 = sadd.s32 %s55, 1
      %p59 = scmp.eq.s32.totalorder %s21, 1
      %p60 = scmp.ne.s32.totalorder %s55, %s57
      %p61 = scmp.eq.s32.totalorder %s21, 0
      %p62 = por %p60, %p61
      %p63 = scmp.ne.s32.totalorder %s55, %s57
      %p64 = scmp.eq.s32.totalorder %s26, 1
      %p65 = por %p63, %p64
      %p66 = scmp.ne.s32.totalorder %s57, %s58
      %p67 = scmp.eq.s32.totalorder %s26, 0
      %p68 = por %p66, %p67
      %p69 = scmp.ne.s32.totalorder %s57, %s58
      %p70 = scmp.eq.s32.totalorder %s27, 1
      %p71 = por %p69, %p70
      %p73 = scmp.ne.s32.totalorder %s58, %s72
      %p74 = scmp.eq.s32.totalorder %s27, 0
      %p75 = por %p73, %p74
      %s77 = sadd.s32 %s76, 1
      %p80 = scmp.eq.s32.totalorder %s21, 1
      %p81 = scmp.ne.s32.totalorder %s76, %s78
      %p82 = scmp.eq.s32.totalorder %s21, 0
      %p83 = por %p81, %p82
      %p84 = scmp.ne.s32.totalorder %s76, %s78
      %p85 = scmp.eq.s32.totalorder %s26, 1
      %p86 = por %p84, %p85
      %p87 = scmp.ne.s32.totalorder %s78, %s79
      %p88 = scmp.eq.s32.totalorder %s26, 0
      %p89 = por %p87, %p88
      %p90 = scmp.ne.s32.totalorder %s78, %s79
      %p91 = scmp.eq.s32.totalorder %s27, 1
      %p92 = por %p90, %p91
      %p94 = scmp.ne.s32.totalorder %s79, %s93
      %p95 = scmp.eq.s32.totalorder %s27, 0
      %p96 = por %p94, %p95
      %s98 = sadd.s32 %s97, 1
      %p101 = scmp.eq.s32.totalorder %s21, 1
      %p102 = scmp.ne.s32.totalorder %s97, %s99
      %p103 = scmp.eq.s32.totalorder %s21, 0
      %p104 = por %p102, %p103
      %p105 = scmp.ne.s32.totalorder %s97, %s99
      %p106 = scmp.eq.s32.totalorder %s26, 1
      %p107 = por %p105, %p106
      %p108 = scmp.ne.s32.totalorder %s99, %s100
      %p109 = scmp.eq.s32.totalorder %s26, 0
      %p110 = por %p108, %p109
      %p111 = scmp.ne.s32.totalorder %s99, %s100
      %p112 = scmp.eq.s32.totalorder %s27, 1
      %p113 = por %p111, %p112
      %p115 = scmp.ne.s32.totalorder %s100, %s114
      %p116 = scmp.eq.s32.totalorder %s27, 0
      %p117 = por %p115, %p116
      %s119 = sadd.s32 %s118, 1
      %p122 = scmp.eq.s32.totalorder %s21, 1
      %p123 = scmp.ne.s32.totalorder %s118, %s120
      %p124 = scmp.eq.s32.totalorder %s21, 0
      %p125 = por %p123, %p124
      %p126 = scmp.ne.s32.totalorder %s118, %s120
      %p127 = scmp.eq.s32.totalorder %s26, 1
      %p128 = por %p126, %p127
      %p129 = scmp.ne.s32.totalorder %s120, %s121
      %p130 = scmp.eq.s32.totalorder %s26, 0
      %p131 = por %p129, %p130
      %p132 = scmp.ne.s32.totalorder %s120, %s121
      %p133 = scmp.eq.s32.totalorder %s27, 1
      %p134 = por %p132, %p133
      %p136 = scmp.ne.s32.totalorder %s121, %s135
      %p137 = scmp.eq.s32.totalorder %s27, 0
      %p138 = por %p136, %p137
      %s140 = sadd.s32 %s139, 1
      %p143 = scmp.eq.s32.totalorder %s21, 1
      %p144 = scmp.ne.s32.totalorder %s139, %s141
      %p145 = scmp.eq.s32.totalorder %s21, 0
      %p146 = por %p144, %p145
      %p147 = scmp.ne.s32.totalorder %s139, %s141
      %p148 = scmp.eq.s32.totalorder %s26, 1
      %p149 = por %p147, %p148
      %p150 = scmp.ne.s32.totalorder %s141, %s142
      %p151 = scmp.eq.s32.totalorder %s26, 0
      %p152 = por %p150, %p151
      %p153 = scmp.ne.s32.totalorder %s141, %s142
      %p154 = scmp.eq.s32.totalorder %s27, 1
      %p155 = por %p153, %p154
      %p157 = scmp.ne.s32.totalorder %s142, %s156
      %p158 = scmp.eq.s32.totalorder %s27, 0
      %p159 = por %p157, %p158
      %s161 = sadd.s32 %s160, 1
      %p164 = scmp.eq.s32.totalorder %s21, 1
      %p165 = scmp.ne.s32.totalorder %s160, %s162
      %p166 = scmp.eq.s32.totalorder %s21, 0
      %p167 = por %p165, %p166
      %p168 = scmp.ne.s32.totalorder %s160, %s162
      %p169 = scmp.eq.s32.totalorder %s26, 1
      %p170 = por %p168, %p169
      %p171 = scmp.ne.s32.totalorder %s162, %s163
      %p172 = scmp.eq.s32.totalorder %s26, 0
      %p173 = por %p171, %p172
      %p174 = scmp.ne.s32.totalorder %s162, %s163
      %p175 = scmp.eq.s32.totalorder %s27, 1
      %p176 = por %p174, %p175
      %p178 = scmp.ne.s32.totalorder %s163, %s177
      %p179 = scmp.eq.s32.totalorder %s27, 0
      %p180 = por %p178, %p179
      %s182 = sadd.s32 %s181, 1
      %p185 = scmp.eq.s32.totalorder %s21, 1
      %p186 = scmp.ne.s32.totalorder %s181, %s183
      %p187 = scmp.eq.s32.totalorder %s21, 0
      %p188 = por %p186, %p187
      %p189 = scmp.ne.s32.totalorder %s181, %s183
      %p190 = scmp.eq.s32.totalorder %s26, 1
      %p191 = por %p189, %p190
      %p192 = scmp.ne.s32.totalorder %s183, %s184
      %p193 = scmp.eq.s32.totalorder %s26, 0
      %p194 = por %p192, %p193
      %p195 = scmp.ne.s32.totalorder %s183, %s184
      %p196 = scmp.eq.s32.totalorder %s27, 1
      %p197 = por %p195, %p196
      %p199 = scmp.ne.s32.totalorder %s184, %s198
      %p200 = scmp.eq.s32.totalorder %s27, 0
      %p201 = por %p199, %p200
      %s203 = sadd.s32 %s202, 1
      %p206 = scmp.eq.s32.totalorder %s21, 1
      %p207 = scmp.ne.s32.totalorder %s202, %s204
      %p208 = scmp.eq.s32.totalorder %s21, 0
      %p209 = por %p207, %p208
      %p210 = scmp.ne.s32.totalorder %s202, %s204
      %p211 = scmp.eq.s32.totalorder %s26, 1
      %p212 = por %p210, %p211
      %p213 = scmp.ne.s32.totalorder %s204, %s205
      %p214 = scmp.eq.s32.totalorder %s26, 0
      %p215 = por %p213, %p214
      %p216 = scmp.ne.s32.totalorder %s204, %s205
      %p217 = scmp.eq.s32.totalorder %s27, 1
      %p218 = por %p216, %p217
      %p220 = scmp.ne.s32.totalorder %s205, %s219
      %p221 = scmp.eq.s32.totalorder %s27, 0
      %p222 = por %p220, %p221
      %s223 = ssub.s32 %s21, %s28
      %p224 = scmp.eq.s32.totalorder %s223, 0
      %s226 = sadd.s32 %s225, 1
      %s227 = scalar_select %p224, %s225, %s226
      %p230 = pneg %p224
      %p231 = scmp.eq.s32.totalorder %s21, 1
      %p232 = por %p230, %p231
      %p233 = scmp.ne.s32.totalorder %s225, %s228
      %p234 = scmp.eq.s32.totalorder %s21, 0
      %p235 = por %p233, %p234
      %p236 = scmp.ne.s32.totalorder %s225, %s228
      %p237 = scmp.eq.s32.totalorder %s26, 1
      %p238 = por %p236, %p237
      %p239 = scmp.ne.s32.totalorder %s228, %s229
      %p240 = scmp.eq.s32.totalorder %s26, 0
      %p241 = por %p239, %p240
      %p242 = scmp.ne.s32.totalorder %s228, %s229
      %p243 = scmp.eq.s32.totalorder %s27, 1
      %p244 = por %p242, %p243
      %p246 = scmp.ne.s32.totalorder %s229, %s245
      %p247 = scmp.eq.s32.totalorder %s27, 0
      %p248 = por %p246, %p247
      %s249 = ssub.s32 %s21, %s28
      %p250 = scmp.eq.s32.totalorder %s249, 0
      %s252 = sadd.s32 %s251, 1
      %s253 = scalar_select %p250, %s251, %s252
      %p256 = pneg %p250
      %p257 = scmp.eq.s32.totalorder %s21, 1
      %p258 = por %p256, %p257
      %p259 = scmp.ne.s32.totalorder %s251, %s254
      %p260 = scmp.eq.s32.totalorder %s21, 0
      %p261 = por %p259, %p260
      %p262 = scmp.ne.s32.totalorder %s251, %s254
      %p263 = scmp.eq.s32.totalorder %s26, 1
      %p264 = por %p262, %p263
      %p265 = scmp.ne.s32.totalorder %s254, %s255
      %p266 = scmp.eq.s32.totalorder %s26, 0
      %p267 = por %p265, %p266
      %p268 = scmp.ne.s32.totalorder %s254, %s255
      %p269 = scmp.eq.s32.totalorder %s27, 1
      %p270 = por %p268, %p269
      %p272 = scmp.ne.s32.totalorder %s255, %s271
      %p273 = scmp.eq.s32.totalorder %s27, 0
      %p274 = por %p272, %p273
      %s275 = ssub.s32 %s21, %s28
      %p276 = scmp.eq.s32.totalorder %s275, 0
      %s278 = sadd.s32 %s277, 1
      %s279 = scalar_select %p276, %s277, %s278
      %p282 = pneg %p276
      %p283 = scmp.eq.s32.totalorder %s21, 1
      %p284 = por %p282, %p283
      %p285 = scmp.ne.s32.totalorder %s277, %s280
      %p286 = scmp.eq.s32.totalorder %s21, 0
      %p287 = por %p285, %p286
      %p288 = scmp.ne.s32.totalorder %s277, %s280
      %p289 = scmp.eq.s32.totalorder %s26, 1
      %p290 = por %p288, %p289
      %p291 = scmp.ne.s32.totalorder %s280, %s281
      %p292 = scmp.eq.s32.totalorder %s26, 0
      %p293 = por %p291, %p292
      %p294 = scmp.ne.s32.totalorder %s280, %s281
      %p295 = scmp.eq.s32.totalorder %s27, 1
      %p296 = por %p294, %p295
      %p298 = scmp.ne.s32.totalorder %s281, %s297
      %p299 = scmp.eq.s32.totalorder %s27, 0
      %p300 = por %p298, %p299
      %p301 = scmp.le.s32.totalorder 1, %s21
      %p302 = scmp.lt.s32.totalorder %s21, 3
      %p303 = pnand %p301, %p302
      %p304 = pneg %p303
      // Predicated region
      $region9: #{tpu_custom_call.1} parent=5 // pred_check
        _
      $region10: #{tpu_custom_call.1} parent=5 // pred_check_branch
        %306 = sbr.rel (%p303) target = $region12
      $region11: #{tpu_custom_call.1} parent=5 // pred_region
        %s307 = ssub.s32 %s21, 1
        // Predicated region
        $region13: #{tpu_custom_call.1} parent=11 // pred_check
          %p308 = pneg %p68
        $region14: #{tpu_custom_call.1} parent=11 // pred_check_branch
          %310 = sbr.rel (%p308) target = $region16
        $region15: #{tpu_custom_call.1} parent=11 // pred_region
          _
        $region16: #{tpu_custom_call.1} parent=11 // pred_fallthru
          _
        // Predicated region
        $region17: #{tpu_custom_call.1} parent=11 // pred_check
          %p311 = pneg %p89
        $region18: #{tpu_custom_call.1} parent=11 // pred_check_branch
          %313 = sbr.rel (%p311) target = $region20
        $region19: #{tpu_custom_call.1} parent=11 // pred_region
          _
        $region20: #{tpu_custom_call.1} parent=11 // pred_fallthru
          _
        // Predicated region
        $region21: #{tpu_custom_call.1} parent=11 // pred_check
          %p314 = pneg %p110
        $region22: #{tpu_custom_call.1} parent=11 // pred_check_branch
          %316 = sbr.rel (%p314) target = $region24
        $region23: #{tpu_custom_call.1} parent=11 // pred_region
          _
        $region24: #{tpu_custom_call.1} parent=11 // pred_fallthru
          _
        // Predicated region
        $region25: #{tpu_custom_call.1} parent=11 // pred_check
          %p317 = pneg %p131
        $region26: #{tpu_custom_call.1} parent=11 // pred_check_branch
          %319 = sbr.rel (%p317) target = $region28
        $region27: #{tpu_custom_call.1} parent=11 // pred_region
          _
        $region28: #{tpu_custom_call.1} parent=11 // pred_fallthru
          _
        // Predicated region
        $region29: #{tpu_custom_call.1} parent=11 // pred_check
          %p320 = pneg %p152
        $region30: #{tpu_custom_call.1} parent=11 // pred_check_branch
          %322 = sbr.rel (%p320) target = $region32
        $region31: #{tpu_custom_call.1} parent=11 // pred_region
          _
        $region32: #{tpu_custom_call.1} parent=11 // pred_fallthru
          _
        // Predicated region
        $region33: #{tpu_custom_call.1} parent=11 // pred_check
          %p323 = pneg %p173
        $region34: #{tpu_custom_call.1} parent=11 // pred_check_branch
          %325 = sbr.rel (%p323) target = $region36
        $region35: #{tpu_custom_call.1} parent=11 // pred_region
          _
        $region36: #{tpu_custom_call.1} parent=11 // pred_fallthru
          _
        // Predicated region
        $region37: #{tpu_custom_call.1} parent=11 // pred_check
          %p326 = pneg %p194
        $region38: #{tpu_custom_call.1} parent=11 // pred_check_branch
          %328 = sbr.rel (%p326) target = $region40
        $region39: #{tpu_custom_call.1} parent=11 // pred_region
          _
        $region40: #{tpu_custom_call.1} parent=11 // pred_fallthru
          _
        // Predicated region
        $region41: #{tpu_custom_call.1} parent=11 // pred_check
          %p329 = pneg %p215
        $region42: #{tpu_custom_call.1} parent=11 // pred_check_branch
          %331 = sbr.rel (%p329) target = $region44
        $region43: #{tpu_custom_call.1} parent=11 // pred_region
          _
        $region44: #{tpu_custom_call.1} parent=11 // pred_fallthru
          _
      $region12: #{tpu_custom_call.1} parent=5 // pred_fallthru
        _
      %p332 = scmp.lt.s32.totalorder %s21, 2
      // Predicated region
      $region45: #{tpu_custom_call.1} parent=5 // pred_check
        %p333 = pneg %p332
      $region46: #{tpu_custom_call.1} parent=5 // pred_check_branch
        %335 = sbr.rel (%p333) target = $region48
      $region47: #{tpu_custom_call.1} parent=5 // pred_region
        // Predicated region
        $region49: #{tpu_custom_call.1} parent=47 // pred_check
          %p336 = pneg %p41
        $region50: #{tpu_custom_call.1} parent=47 // pred_check_branch
          %338 = sbr.rel (%p336) target = $region52
        $region51: #{tpu_custom_call.1} parent=47 // pred_region
          %p339 = scmp.lt.s32.totalorder %s21, 1
          %s340 = scalar_select %p339, %s21, 1
          %s341 = smul.addr %s340, 2
          %s342 = smul.addr %s341, 4
          %s343 = scalar_lea.vmem %s0, %s342
        $region52: #{tpu_custom_call.1} parent=47 // pred_fallthru
          _
      $region48: #{tpu_custom_call.1} parent=5 // pred_fallthru
        _
      %p344 = scmp.le.s32.totalorder 1, %s21
      %p345 = scmp.lt.s32.totalorder %s21, 3
      %p346 = pnand %p344, %p345
      %p347 = pneg %p346
      // Predicated region
      $region53: #{tpu_custom_call.1} parent=5 // pred_check
        _
      $region54: #{tpu_custom_call.1} parent=5 // pred_check_branch
        %349 = sbr.rel (%p346) target = $region56
      $region55: #{tpu_custom_call.1} parent=5 // pred_region
        %s350 = ssub.s32 %s21, 1
        %p351 = scmp.lt.s32.totalorder %s26, 1
        %s352 = scalar_select %p351, %s26, 1
        %s353 = smul.addr %s352, 2
        %s354 = smul.addr %s353, 4
        %s355 = scalar_lea.vmem %s0, %s354
        %p356 = pneg %p47
        %p357 = pneg %p44
        %p358 = pneg %p68
        %p359 = pneg %p65
        %p360 = pneg %p89
        %p361 = pneg %p86
        %p362 = pneg %p110
        %p363 = pneg %p107
        %p364 = pneg %p131
        %p365 = pneg %p128
        %p366 = pneg %p152
        %p367 = pneg %p149
        %p368 = pneg %p173
        %p369 = pneg %p170
        %p370 = pneg %p194
        %p371 = pneg %p191
        %p372 = pneg %p215
        %p373 = pneg %p212
        %p374 = pneg %p241
        %p375 = pneg %p238
        %s376 = sand.u32 %s228, 1
        %s377 = scalar_lea.sflag [#allocation5], %s376
        %s378 = sand.u32 %s228, 1
        %s379 = smul.addr %s378, 16
        %s380 = scalar_lea.vmem [#allocation4], %s379
        %p381 = pneg %p267
        %p382 = pneg %p264
        %p383 = scmp.lt.s32.totalorder %s26, 1
        %s384 = scalar_select %p383, %s26, 1
        %s385 = smul.addr %s384, 8
        %s386 = scalar_lea.vmem %s10, %s385
        %p387 = pneg %p293
        %p388 = pneg %p290
        %p389 = scmp.lt.s32.totalorder %s26, 1
        %s390 = scalar_select %p389, %s26, 1
        %s391 = smul.addr %s390, 8
        %s392 = scalar_lea.vmem %s11, %s391
        %p393 = scmp.lt.s32.totalorder %s26, 1
        %s394 = scalar_select %p393, %s26, 1
        %s395 = smul.addr %s394, 2
        %s396 = smul.addr %s395, 4
        %s397 = scalar_lea.vmem %s0, %s396
        %p398 = scmp.lt.s32.totalorder %s26, 1
        %s399 = scalar_select %p398, %s26, 1
        %s400 = smul.addr %s399, 8
        %s401 = scalar_lea.vmem %s10, %s400
        %p402 = scmp.lt.s32.totalorder %s26, 1
        %s403 = scalar_select %p402, %s26, 1
        %s404 = smul.addr %s403, 8
        %s405 = scalar_lea.vmem %s11, %s404
        %v406 = vld [vmem:[%s397] sm:$0xff]
        %v407 = vld [vmem:[%s1] sm:$0xf]
        %409 = vset.pattern.permute.xlu0 0
        %410 = vperm.xlu0 %409, %v407
        %v411 = vpop.permute.xlu0 %410
        %v413 = vunpack.c.l.s4 839922192
        %v414 = vunpack.c.0.s8 %v413
        %v415 = vlaneseq
        %v416 = vshrl.u32 %v415, 7
        %v417 = vsub.s32 %v414, %v416
        %v418 = vrot.slane %v411, %v417
        %v420 = vmul.f32 %v406, %v418
        %v421 = vld [vmem:[%s2] sm:$0xf]
        %423 = vset.pattern.permute.xlu0 0
        %424 = vperm.xlu0 %423, %v421
        %v425 = vpop.permute.xlu0 %424
        %v427 = vunpack.c.l.s4 839922192
        %v428 = vunpack.c.0.s8 %v427
        %v429 = vlaneseq
        %v430 = vshrl.u32 %v429, 7
        %v431 = vsub.s32 %v428, %v430
        %v432 = vrot.slane %v425, %v431
        %v434 = vadd.f32 %v420, %v432
        %vm435 = vcmask 125952
        %436 = vst.msk [vmem:[#allocation2] sm:$0xf] %vm435, 0.0
        %vm437 = vcmask 257152
        %438 = vst.msk [vmem:[#allocation2 + $0x8] sm:$0xf] %vm437, 0.0
        %440 = vrot.lane.b32.xlu0 %v434, 16
        %v441 = vpop.permute.xlu0 %440
        %v442 = vrot.slane %v441, 4
        %vm443 = vcmask 130048
        %v444 = vsel %vm443, %v442, %v441
        %vm447 = vcmask 1043584
        %vm448 = vcmask 1047556
        %vm449 = vmor %vm448, %vm447
        %450 = vst.msk [vmem:[#allocation2] sm:$0xff] %vm449, %v444
        %451 = vst.msk [vmem:[#allocation2 + $0x8] sm:$0xf] %vm435, %v442
        %v452 = vld [vmem:[#allocation2] sm:$0xff]
        %v453 = vld [vmem:[%s3] sm:$0xf]
        %455 = vset.pattern.permute.xlu0 0
        %456 = vperm.xlu0 %455, %v453
        %v457 = vpop.permute.xlu0 %456
        %v459 = vunpack.c.l.s4 839922192
        %v460 = vunpack.c.0.s8 %v459
        %v461 = vlaneseq
        %v462 = vshrl.u32 %v461, 7
        %v463 = vsub.s32 %v460, %v462
        %v464 = vrot.slane %v457, %v463
        %v466 = vmul.f32 %v452, %v464
        %v467 = vld [vmem:[%s4] ss:$4 sm:$0x3]
        %v469 = vlaneseq
        %v470 = vshrl.u32 %v469, 7
        %v471 = vsub.s32 0, %v470
        %v472 = vrot.slane %v467, %v471
        %v473 = vlaneseq
        %v474 = vshrl.u32 %v473, 7
        %v475 = vsub.s32 1, %v474
        %v476 = vrot.slane %v467, %v475
        %v477 = vcombine.low %v472, %v476
        %v479 = vmul.f32 %v466, %v477
        %v480 = vld [vmem:[#allocation2] sm:$0xff]
        %v481 = vld [vmem:[#allocation2 + $0x8] sm:$0xf]
        %v482 = vld [vmem:[%s3] sm:$0xf]
        %484 = vset.pattern.permute.xlu0 1
        %485 = vperm.xlu0 %484, %v482
        %v486 = vpop.permute.xlu0 %485
        %v488 = vunpack.c.l.s4 839922192
        %v489 = vunpack.c.0.s8 %v488
        %v490 = vlaneseq
        %v491 = vshrl.u32 %v490, 7
        %v492 = vsub.s32 %v489, %v491
        %v493 = vrot.slane %v486, %v492
        %v495 = vmul.f32 %v480, %v493
        %v496 = vmul.f32 %v481, %v493
        %s497 = scalar_lea.vmem %s4, 1
        %v498 = vld [vmem:[%s497] ss:$4 sm:$0x3]
        %v500 = vlaneseq
        %v501 = vshrl.u32 %v500, 7
        %v502 = vsub.s32 0, %v501
        %v503 = vrot.slane %v498, %v502
        %v504 = vlaneseq
        %v505 = vshrl.u32 %v504, 7
        %v506 = vsub.s32 1, %v505
        %v507 = vrot.slane %v498, %v506
        %v508 = vcombine.low %v503, %v507
        %509 = vrot.lane.b32.xlu0 %v508, 16
        %v510 = vpop.permute.xlu0 %509
        %v511 = vrot.slane %v510, 4
        %v512 = vsel %vm443, %v511, %v510
        %v515 = vmul.f32 %v495, %v512
        %v516 = vmul.f32 %v496, %v511
        %519 = vrot.lane.b32.xlu0 %v515, 112
        %v520 = vpop.permute.xlu0 %519
        %521 = vrot.lane.b32.xlu0 %v516, 112
        %v522 = vpop.permute.xlu0 %521
        %v523 = vrot.slane %v520, 4
        %v524 = vrot.slane %v522, 4
        %vm525 = vcmask 1043456
        %v526 = vsel %vm525, %v523, %v524
        %vm527 = vcmask 916480
        %v528 = vsel %vm527, %v520, %v526
        %v530 = vadd.f32 %v479, %v528
        %v531 = vld [vmem:[#allocation2] sm:$0xff]
        %v532 = vld [vmem:[#allocation2 + $0x8] sm:$0xf]
        %v533 = vld [vmem:[%s3] sm:$0xf]
        %535 = vset.pattern.permute.xlu0 2
        %536 = vperm.xlu0 %535, %v533
        %v537 = vpop.permute.xlu0 %536
        %v539 = vunpack.c.l.s4 839922192
        %v540 = vunpack.c.0.s8 %v539
        %v541 = vlaneseq
        %v542 = vshrl.u32 %v541, 7
        %v543 = vsub.s32 %v540, %v542
        %v544 = vrot.slane %v537, %v543
        %v546 = vmul.f32 %v531, %v544
        %v547 = vmul.f32 %v532, %v544
        %s548 = scalar_lea.vmem %s4, 2
        %v549 = vld [vmem:[%s548] ss:$4 sm:$0x3]
        %v551 = vlaneseq
        %v552 = vshrl.u32 %v551, 7
        %v553 = vsub.s32 0, %v552
        %v554 = vrot.slane %v549, %v553
        %v555 = vlaneseq
        %v556 = vshrl.u32 %v555, 7
        %v557 = vsub.s32 1, %v556
        %v558 = vrot.slane %v549, %v557
        %v559 = vcombine.low %v554, %v558
        %560 = vrot.lane.b32.xlu0 %v559, 32
        %v561 = vpop.permute.xlu0 %560
        %v562 = vrot.slane %v561, 4
        %vm563 = vcmask 261120
        %v564 = vsel %vm563, %v562, %v561
        %v567 = vmul.f32 %v546, %v564
        %v568 = vmul.f32 %v547, %v562
        %571 = vrot.lane.b32.xlu0 %v567, 96
        %v572 = vpop.permute.xlu0 %571
        %573 = vrot.lane.b32.xlu0 %v568, 96
        %v574 = vpop.permute.xlu0 %573
        %v575 = vrot.slane %v572, 4
        %v576 = vrot.slane %v574, 4
        %v577 = vsel %vm525, %v575, %v576
        %vm578 = vcmask 785408
        %v579 = vsel %vm578, %v572, %v577
        %v581 = vadd.f32 %v530, %v579
        %v582 = vld [vmem:[%s5] sm:$0xff]
        %v583 = vld [vmem:[%s6] sm:$0xff]
        %585 = vset.pattern.permute.xlu0 0
        %586 = vperm.xlu0 %585, %v583
        %v587 = vpop.permute.xlu0 %586
        %v590 = vcombine.high %v581, %v581
        %vm591 = vcmask 31744
        %v593 = vsel %vm591, %v582, 0
        %v595 = vsel %vm525, %v581, 0
        %v597 = vsel %vm525, %v590, 0
        %599 = vmatprep.subr.mxu0 %v597
        %600 = vmatpush1.msra.mxu0 %v595
        %601 = vmatprep.subr.mxu0 0.0
        %602 = vmatpush1.msra.mxu0 0.0
        %603 = vmatprep.subr.mxu0 0.0
        %604 = vmatpush1.msra.mxu0 0.0
        %605 = vmatprep.subr.mxu0 0.0
        %606 = vmatpush1.msra.mxu0 0.0
        %607 = vmatprep.subr.mxu0 0.0
        %608 = vmatpush1.msra.mxu0 0.0
        %609 = vmatprep.subr.mxu0 0.0
        %610 = vmatpush1.msra.mxu0 0.0
        %611 = vmatprep.subr.mxu0 0.0
        %612 = vmatpush1.msra.mxu0 0.0
        %613 = vmatprep.subr.mxu0 0.0
        %614 = vmatpush1.msra.mxu0 0.0
        %615 = vmatprep.subr.mxu0 0.0
        %616 = vmatpush1.msra.mxu0 0.0
        %617 = vmatprep.subr.mxu0 0.0
        %618 = vmatpush1.msra.mxu0 0.0
        %619 = vmatprep.subr.mxu0 0.0
        %620 = vmatpush1.msra.mxu0 0.0
        %621 = vmatprep.subr.mxu0 0.0
        %622 = vmatpush1.msra.mxu0 0.0
        %623 = vmatprep.subr.mxu0 0.0
        %624 = vmatpush1.msra.mxu0 0.0
        %625 = vmatprep.subr.mxu0 0.0
        %626 = vmatpush1.msra.mxu0 0.0
        %627 = vmatprep.subr.mxu0 0.0
        %628 = vmatpush1.msra.mxu0 0.0
        %629 = vmatprep.subr.mxu0 0.0
        %630 = vmatpush1.msra.mxu0 0.0
        %631 = vmatprep.subr.mxu0 0.0
        %632 = vmatpush1.msra.mxu0 0.0
        %633 = vmatprep.subr.mxu0 0.0
        %634 = vmatpush1.msra.mxu0 0.0
        %635 = vmatprep.subr.mxu0 0.0
        %636 = vmatpush1.msra.mxu0 0.0
        %637 = vmatprep.subr.mxu0 0.0
        %638 = vmatpush1.msra.mxu0 0.0
        %639 = vmatprep.subr.mxu0 0.0
        %640 = vmatpush1.msra.mxu0 0.0
        %641 = vmatprep.subr.mxu0 0.0
        %642 = vmatpush1.msra.mxu0 0.0
        %643 = vmatprep.subr.mxu0 0.0
        %644 = vmatpush1.msra.mxu0 0.0
        %645 = vmatprep.subr.mxu0 0.0
        %646 = vmatpush1.msra.mxu0 0.0
        %647 = vmatprep.subr.mxu0 0.0
        %648 = vmatpush1.msra.mxu0 0.0
        %649 = vmatprep.subr.mxu0 0.0
        %650 = vmatpush1.msra.mxu0 0.0
        %651 = vmatprep.subr.mxu0 0.0
        %652 = vmatpush1.msra.mxu0 0.0
        %653 = vmatprep.subr.mxu0 0.0
        %654 = vmatpush1.msra.mxu0 0.0
        %655 = vmatprep.subr.mxu0 0.0
        %656 = vmatpush1.msra.mxu0 0.0
        %657 = vmatprep.subr.mxu0 0.0
        %658 = vmatpush1.msra.mxu0 0.0
        %659 = vmatprep.subr.mxu0 0.0
        %660 = vmatpush1.msra.mxu0 0.0
        %661 = vmatprep.subr.mxu0 0.0
        %662 = vmatpush1.msra.mxu0 0.0
        %663 = vmatprep.mubr.f32.mxu0 0.0
        %664 = vmatmul.mubr.f32.gmra.mrb[0].mxu0 %v593
        %v665 = vpop.f32.mrb[0].mxu0
        %v666 = vadd.f32 %v587, %v665
        %v667 = vpop.f32.mrb[0].mxu0
        %v668 = vadd.f32 %v587, %v667
        %669 = vdwg.mxu0
        %v670 = vmax.f32 %v666, 0.0
        %v671 = vmax.f32 %v668, 0.0
        %672 = vst.msk [vmem:[#allocation3] sm:$0xff] %vm443, 0.0
        %vm673 = vcmask 261248
        %674 = vst.msk [vmem:[#allocation3 + $0x10] sm:$0xff] %vm673, 0.0
        %677 = vrot.lane.b32.xlu0 %v670, 16
        %v678 = vpop.permute.xlu0 %677
        %679 = vrot.lane.b32.xlu0 %v671, 16
        %v680 = vpop.permute.xlu0 %679
        %v681 = vsel %vm443, %v678, %v680
        %vm685 = vcmask 1047680
        %686 = vst.msk [vmem:[#allocation3] sm:$0xff] %vm685, %v678
        %687 = vst [vmem:[#allocation3 + $0x8] sm:$0xff] %v681
        %688 = vst.msk [vmem:[#allocation3 + $0x10] sm:$0xff] %vm443, %v680
        %v689 = vld [vmem:[#allocation3] sm:$0xff]
        %v690 = vld [vmem:[#allocation3 + $0x8] sm:$0xff]
        %v691 = vld [vmem:[%s7] sm:$0xff]
        %693 = vset.pattern.permute.xlu0 0
        %694 = vperm.xlu0 %693, %v691
        %v695 = vpop.permute.xlu0 %694
        %v697 = vmul.f32 %v689, %v695
        %v698 = vmul.f32 %v690, %v695
        %v699 = vld [vmem:[%s8] ss:$4 sm:$0x3]
        %v701 = vlaneseq
        %v702 = vshrl.u32 %v701, 7
        %v703 = vsub.s32 0, %v702
        %v704 = vrot.slane %v699, %v703
        %v705 = vlaneseq
        %v706 = vshrl.u32 %v705, 7
        %v707 = vsub.s32 1, %v706
        %v708 = vrot.slane %v699, %v707
        %v711 = vmul.f32 %v697, %v704
        %v712 = vmul.f32 %v698, %v708
        %v713 = vld [vmem:[#allocation3] sm:$0xff]
        %v714 = vld [vmem:[#allocation3 + $0x8] sm:$0xff]
        %v715 = vld [vmem:[#allocation3 + $0x10] sm:$0xff]
        %716 = vset.pattern.permute.xlu0 1
        %717 = vperm.xlu0 %716, %v691
        %v718 = vpop.permute.xlu0 %717
        %v720 = vmul.f32 %v713, %v718
        %v721 = vmul.f32 %v714, %v718
        %v722 = vmul.f32 %v715, %v718
        %s723 = scalar_lea.vmem %s8, 1
        %v724 = vld [vmem:[%s723] ss:$4 sm:$0x3]
        %v726 = vlaneseq
        %v727 = vshrl.u32 %v726, 7
        %v728 = vsub.s32 0, %v727
        %v729 = vrot.slane %v724, %v728
        %v730 = vlaneseq
        %v731 = vshrl.u32 %v730, 7
        %v732 = vsub.s32 1, %v731
        %v733 = vrot.slane %v724, %v732
        %734 = vrot.lane.b32.xlu0 %v729, 16
        %v735 = vpop.permute.xlu0 %734
        %736 = vrot.lane.b32.xlu0 %v733, 16
        %v737 = vpop.permute.xlu0 %736
        %v738 = vsel %vm443, %v735, %v737
        %v742 = vmul.f32 %v720, %v735
        %v743 = vmul.f32 %v721, %v738
        %v744 = vmul.f32 %v722, %v737
        %748 = vrot.lane.b32.xlu0 %v742, 112
        %v749 = vpop.permute.xlu0 %748
        %750 = vrot.lane.b32.xlu0 %v743, 112
        %v751 = vpop.permute.xlu0 %750
        %752 = vrot.lane.b32.xlu0 %v744, 112
        %v753 = vpop.permute.xlu0 %752
        %v754 = vsel %vm527, %v749, %v751
        %v755 = vsel %vm527, %v751, %v753
        %v758 = vadd.f32 %v711, %v754
        %v759 = vadd.f32 %v712, %v755
        %760 = vset.pattern.permute.xlu0 2
        %761 = vperm.xlu0 %760, %v691
        %v762 = vpop.permute.xlu0 %761
        %v764 = vmul.f32 %v713, %v762
        %v765 = vmul.f32 %v714, %v762
        %v766 = vmul.f32 %v715, %v762
        %s767 = scalar_lea.vmem %s8, 2
        %v768 = vld [vmem:[%s767] ss:$4 sm:$0x3]
        %v770 = vlaneseq
        %v771 = vshrl.u32 %v770, 7
        %v772 = vsub.s32 0, %v771
        %v773 = vrot.slane %v768, %v772
        %v774 = vlaneseq
        %v775 = vshrl.u32 %v774, 7
        %v776 = vsub.s32 1, %v775
        %v777 = vrot.slane %v768, %v776
        %778 = vrot.lane.b32.xlu0 %v773, 32
        %v779 = vpop.permute.xlu0 %778
        %780 = vrot.lane.b32.xlu0 %v777, 32
        %v781 = vpop.permute.xlu0 %780
        %v782 = vsel %vm563, %v779, %v781
        %v786 = vmul.f32 %v764, %v779
        %v787 = vmul.f32 %v765, %v782
        %v788 = vmul.f32 %v766, %v781
        %792 = vrot.lane.b32.xlu0 %v786, 96
        %v793 = vpop.permute.xlu0 %792
        %794 = vrot.lane.b32.xlu0 %v787, 96
        %v795 = vpop.permute.xlu0 %794
        %796 = vrot.lane.b32.xlu0 %v788, 96
        %v797 = vpop.permute.xlu0 %796
        %v798 = vsel %vm578, %v793, %v795
        %v799 = vsel %vm578, %v795, %v797
        %v802 = vadd.f32 %v758, %v798
        %v803 = vadd.f32 %v759, %v799
        %804 = vst [vmem:[%s380] sm:$0xff] %v802
        %805 = vst [vmem:[%s380 + $0x8] sm:$0xff] %v803
        %v806 = vadd.f32 %v802, %v803
        %807 = vadd.xlane.f32.xlu0 %v806
        %v808 = vpop.xlane.xlu0 %807
        %vm809 = vcmask 7168
        %810 = vst.msk [vmem:[%s401] sm:$0xff] %vm809, %v808
        %v811 = vmul.f32 %v802, %v802
        %v812 = vmul.f32 %v803, %v803
        %v813 = vadd.f32 %v811, %v812
        %814 = vadd.xlane.f32.xlu0 %v813
        %v815 = vpop.xlane.xlu0 %814
        %816 = vst.msk [vmem:[%s405] sm:$0xff] %vm809, %v815
        %s817 = sand.u32 %s228, 1
        %s818 = scalar_lea.sflag [#allocation5], %s817
        %s819 = sand.u32 %s228, 1
        %s820 = smul.addr %s819, 16
        %s821 = scalar_lea.vmem [#allocation4], %s820
        %p822 = scmp.lt.s32.totalorder %s26, 1
        %s823 = scalar_select %p822, %s26, 1
        %s824 = smul.addr %s823, 8
        %s825 = scalar_lea.vmem %s10, %s824
        %p826 = scmp.lt.s32.totalorder %s26, 1
        %s827 = scalar_select %p826, %s26, 1
        %s828 = smul.addr %s827, 8
        %s829 = scalar_lea.vmem %s11, %s828
        // Predicated region
        $region57: #{tpu_custom_call.1} parent=55 // pred_check
          %p830 = pneg %p238
        $region58: #{tpu_custom_call.1} parent=55 // pred_check_branch
          %832 = sbr.rel (%p830) target = $region60
        $region59: #{tpu_custom_call.1} parent=55 // pred_region
          %s834 = ssub.s32 256, 256
          %835 = vsyncadd %s818, %s834
          %s836 = smul.addr %s26, 2
          %s837 = smul.addr %s836, 128
          %s838 = scalar_lea.hbm %s9, %s837
          %s840 = sshll.u32 %s821, 4
          %s841 = int_to_ptr.vmem [resolvable:$true] %s840
          %843 = dma.vmem_to_hbm [thread:$0]  %s841, 256, %s838, %s818
        $region60: #{tpu_custom_call.1} parent=55 // pred_fallthru
          _
        // Predicated region
        $region61: #{tpu_custom_call.1} parent=55 // pred_check
          %p844 = pneg %p264
        $region62: #{tpu_custom_call.1} parent=55 // pred_check_branch
          %846 = sbr.rel (%p844) target = $region64
        $region63: #{tpu_custom_call.1} parent=55 // pred_region
          _
        $region64: #{tpu_custom_call.1} parent=55 // pred_fallthru
          _
        // Predicated region
        $region65: #{tpu_custom_call.1} parent=55 // pred_check
          %p847 = pneg %p290
        $region66: #{tpu_custom_call.1} parent=55 // pred_check_branch
          %849 = sbr.rel (%p847) target = $region68
        $region67: #{tpu_custom_call.1} parent=55 // pred_region
          _
        $region68: #{tpu_custom_call.1} parent=55 // pred_fallthru
          _
      $region56: #{tpu_custom_call.1} parent=5 // pred_fallthru
        _
      %p850 = scmp.le.s32.totalorder 2, %s21
      // Predicated region
      $region69: #{tpu_custom_call.1} parent=5 // pred_check
        %p851 = pneg %p850
      $region70: #{tpu_custom_call.1} parent=5 // pred_check_branch
        %853 = sbr.rel (%p851) target = $region72
      $region71: #{tpu_custom_call.1} parent=5 // pred_region
        %s854 = ssub.s32 %s21, 2
        // Predicated region
        $region73: #{tpu_custom_call.1} parent=71 // pred_check
          %p855 = pneg %p244
        $region74: #{tpu_custom_call.1} parent=71 // pred_check_branch
          %857 = sbr.rel (%p855) target = $region76
        $region75: #{tpu_custom_call.1} parent=71 // pred_region
          %s858 = sand.u32 %s229, 1
          %s859 = scalar_lea.sflag [#allocation5], %s858
          %s860 = sand.u32 %s229, 1
          %s861 = smul.addr %s860, 16
          %s862 = scalar_lea.vmem [#allocation4], %s861
          %863 = dma.done %s859, 256
        $region76: #{tpu_custom_call.1} parent=71 // pred_fallthru
          _
        // Predicated region
        $region77: #{tpu_custom_call.1} parent=71 // pred_check
          %p864 = pneg %p270
        $region78: #{tpu_custom_call.1} parent=71 // pred_check_branch
          %866 = sbr.rel (%p864) target = $region80
        $region79: #{tpu_custom_call.1} parent=71 // pred_region
          %p867 = scmp.lt.s32.totalorder %s27, 1
          %s868 = scalar_select %p867, %s27, 1
          %s869 = smul.addr %s868, 8
          %s870 = scalar_lea.vmem %s10, %s869
        $region80: #{tpu_custom_call.1} parent=71 // pred_fallthru
          _
        // Predicated region
        $region81: #{tpu_custom_call.1} parent=71 // pred_check
          %p871 = pneg %p296
        $region82: #{tpu_custom_call.1} parent=71 // pred_check_branch
          %873 = sbr.rel (%p871) target = $region84
        $region83: #{tpu_custom_call.1} parent=71 // pred_region
          %p874 = scmp.lt.s32.totalorder %s27, 1
          %s875 = scalar_select %p874, %s27, 1
          %s876 = smul.addr %s875, 8
          %s877 = scalar_lea.vmem %s11, %s876
        $region84: #{tpu_custom_call.1} parent=71 // pred_fallthru
          _
      $region72: #{tpu_custom_call.1} parent=5 // pred_fallthru
        _
    $region6: #{tpu_custom_call.1} parent=1 // loop_footer
      %s25 = sadd.s32 1, %s21
    $region7: #{tpu_custom_call.1} parent=1 // loop_footer_branch
      %20 = sbr.rel target = $region3
    $region8: #{tpu_custom_call.1} parent=1 // loop_exit
      _
    %878 = vsyncpa [#allocation5], 1
    %s879 = scalar_lea.sflag [#allocation5], 1
    %880 = vsyncpa %s879, 1

</llo_original>
